<compile_context>
chip_gen: v5e
topology: v5e:2x2
jax: 0.10.0
libtpu: 0.0.40
codegen_flags: <defaults>
</compile_context>

<pallas_src>
import functools

import jax
import jax.numpy as jnp
from jax.experimental import pallas as pl
from jax.experimental.pallas import tpu as pltpu

# ---- model config (small, deterministic) ------------------------------------
VOCAB_SIZE = 30          # config['vocab_size']; embedding table has VOCAB_SIZE+1 rows
HIDDEN = 32              # config['hidden_size']
MAX_LEN = 8              # config['max_length']
MARGIN = 0.1             # config.get('margin', 0.1)
BATCH = 2

V_PAD = 128              # vocab rows padded to a full lane width (extra rows are zero)
H_PAD = 128              # hidden padded to a full lane width (extra cols stay zero)
NORM_EPS_SQ = 1e-24      # F.normalize eps=1e-12, applied to the squared norm


# ---- in-kernel encoder helper ------------------------------------------------
def _encode_rows(ids_col, fused, *, rows, l):
    """one_hot(ids) @ fused  ->  max over the length axis.  Returns (rows, H_PAD).

    ids_col: (rows*l, 1) int32 token ids
    fused  : (V_PAD, H_PAD)   zero-padded (Embedding @ W.T) table; row 0 (padding_idx)
             is zero, so padded positions contribute 0 before the max.
    Bias is NOT added here: max(x + b) == max(x) + b for a per-column constant, so the
    caller adds it once on the pooled (rows, H_PAD) result.
    """
    nl = rows * l
    v, h = fused.shape
    # One-hot lookup on the MXU; rows >= VOCAB_SIZE+1 of the table are zero so ids can
    # never pick up garbage from padding rows.
    iota_v = jax.lax.broadcasted_iota(jnp.int32, (nl, v), 1)
    one_hot = (ids_col == iota_v).astype(jnp.float32)                    # (rows*l, V_PAD)
    hid = jnp.dot(one_hot, fused, preferred_element_type=jnp.float32)    # (rows*l, H_PAD)
    # max_pool1d over the sequence (includes padded positions, like the reference).
    return jnp.max(hid.reshape(rows, l, h), axis=1)                      # (rows, H_PAD)


# ---- Pallas kernels ----------------------------------------------------------
def _train_kernel(ids_ref, fused_ref, b_ref, loss_ref, *, n, l, margin):
    """Fused: encode anchor/positive/negative with ONE matmul, then the triplet loss."""
    pooled = _encode_rows(ids_ref[...], fused_ref[...], rows=3 * n, l=l) + b_ref[...]
    a = pooled[0:n]                                                      # (B, H_PAD)
    p = pooled[n:2 * n]
    g = pooled[2 * n:3 * n]

    # cos(x, y) = <x, y> * rsqrt(|x|^2) * rsqrt(|y|^2)  (rsqrt runs on the EUP).
    inv_a = jax.lax.rsqrt(jnp.maximum(jnp.sum(a * a, axis=-1, keepdims=True), NORM_EPS_SQ))
    inv_p = jax.lax.rsqrt(jnp.maximum(jnp.sum(p * p, axis=-1, keepdims=True), NORM_EPS_SQ))
    inv_g = jax.lax.rsqrt(jnp.maximum(jnp.sum(g * g, axis=-1, keepdims=True), NORM_EPS_SQ))
    cos_ap = jnp.sum(a * p, axis=-1, keepdims=True) * inv_a * inv_p      # (B, 1)
    cos_an = jnp.sum(a * g, axis=-1, keepdims=True) * inv_a * inv_g      # (B, 1)
    # (1 - cos_ap) - (1 - cos_an) + margin == cos_an - cos_ap + margin
    losses = jnp.maximum(cos_an - cos_ap + margin, 0.0)                  # (B, 1)
    loss_ref[0, 0] = jnp.mean(losses)                                    # scalar -> SMEM


def _encode_kernel(ids_ref, fused_ref, b_ref, out_ref, *, n, l):
    """Vectorize-only path: sentence encodings, lane-dense (n, H_PAD) output."""
    out_ref[...] = _encode_rows(ids_ref[...], fused_ref[...], rows=n, l=l) + b_ref[...]


# ---- wrappers ----------------------------------------------------------------
@jax.jit
def siamese_train_loss(params, anchor, positive, negative):
    n, l = anchor.shape
    # One id operand for all three sentences: (3*B*L, 1).  Row-major concat+reshape of
    # tiny int arrays; done outside the kernel so the kernel sees a single DMA.
    ids = jnp.concatenate([anchor, positive, negative], axis=0)
    ids = ids.astype(jnp.int32).reshape(3 * n * l, 1)
    loss = pl.pallas_call(
        functools.partial(_train_kernel, n=n, l=l, margin=MARGIN),
        out_shape=jax.ShapeDtypeStruct((1, 1), jnp.float32),
        in_specs=[pl.BlockSpec(memory_space=pltpu.MemorySpace.VMEM)] * 3,
        out_specs=pl.BlockSpec(memory_space=pltpu.MemorySpace.SMEM),
    )(ids, params["fused_pad"], params["b_pad"])
    return loss[0, 0]


@jax.jit
def siamese_encode(params, anchor):
    n, l = anchor.shape
    ids = anchor.astype(jnp.int32).reshape(n * l, 1)   # row-major bitcast
    vecs = pl.pallas_call(
        functools.partial(_encode_kernel, n=n, l=l),
        out_shape=jax.ShapeDtypeStruct((n, H_PAD), jnp.float32),
        in_specs=[pl.BlockSpec(memory_space=pltpu.MemorySpace.VMEM)] * 3,
        out_specs=pl.BlockSpec(memory_space=pltpu.MemorySpace.VMEM),
    )(ids, params["fused_pad"], params["b_pad"])
    # Lane-dense kernel output; slice the padded columns off once, in the wrapper.
    return vecs[:, :HIDDEN]


def siamese_forward(params, anchor, positive=None, negative=None):
    if positive is not None and negative is not None:
        return siamese_train_loss(params, anchor, positive, negative)
    return siamese_encode(params, anchor)


def init_params(key):
    k_emb, k_w, k_b = jax.random.split(key, 3)
    vocab_rows = VOCAB_SIZE + 1
    emb = jax.random.normal(k_emb, (vocab_rows, HIDDEN), jnp.float32)
    emb = emb.at[0].set(0.0)                                  # padding_idx=0 -> zero row
    bound = 1.0 / (HIDDEN ** 0.5)
    w = jax.random.uniform(k_w, (HIDDEN, HIDDEN), jnp.float32, -bound, bound)
    b = jax.random.uniform(k_b, (HIDDEN,), jnp.float32, -bound, bound)
    # One-time, lane-dense layout prep + weight fold (never done per forward call):
    # fused[v] = Embedding[v] @ W.T ; bias is added post-pooling inside the kernel.
    fused = emb @ w.T                                         # (vocab_rows, HIDDEN)
    fused_pad = jnp.zeros((V_PAD, H_PAD), jnp.float32).at[:vocab_rows, :HIDDEN].set(fused)
    b_pad = jnp.zeros((1, H_PAD), jnp.float32).at[0, :HIDDEN].set(b)
    params = {"fused_pad": fused_pad, "b_pad": b_pad}
    ref_params = {"emb": emb, "w": w, "b": b}                 # unfused, for the reference
    # NOTE: per review, intentionally NO grid / "parallel" split at these sizes -- the
    # whole workload is 48 rows; a grid would only add ~0.35 us/step of overhead.
    return params, ref_params


# ---- pure-JAX reference (for a correctness sanity check) ---------------------
def _ref_encode(ref_params, ids):
    x = ref_params["emb"][ids]                         # (B, L, H)
    x = x @ ref_params["w"].T + ref_params["b"]        # Linear
    return x.max(axis=1)                               # max_pool1d over L -> (B, H)


def _ref_loss(ref_params, a, p, n, margin):
    def cosd(x, y):
        xn = x / jnp.maximum(jnp.linalg.norm(x, axis=-1, keepdims=True), 1e-12)
        yn = y / jnp.maximum(jnp.linalg.norm(y, axis=-1, keepdims=True), 1e-12)
        return 1.0 - jnp.sum(xn * yn, axis=-1)
    av = _ref_encode(ref_params, a)
    pv = _ref_encode(ref_params, p)
    nv = _ref_encode(ref_params, n)
    return jnp.mean(jnp.maximum(cosd(av, pv) - cosd(av, nv) + margin, 0.0))


if __name__ == "__main__":
    key = jax.random.PRNGKey(0)
    k_params, k_a, k_p, k_n = jax.random.split(key, 4)
    params, ref_params = init_params(k_params)

    # Token ids in [1, VOCAB_SIZE]; force a couple of padding (0) positions.
    anchor = jax.random.randint(k_a, (BATCH, MAX_LEN), 1, VOCAB_SIZE + 1, jnp.int32)
    positive = jax.random.randint(k_p, (BATCH, MAX_LEN), 1, VOCAB_SIZE + 1, jnp.int32)
    negative = jax.random.randint(k_n, (BATCH, MAX_LEN), 1, VOCAB_SIZE + 1, jnp.int32)
    anchor = anchor.at[:, -2:].set(0)
    positive = positive.at[:, -1:].set(0)

    # Training mode: scalar triplet loss (fused single-kernel, single-matmul path).
    loss = jax.block_until_ready(siamese_forward(params, anchor, positive, negative))
    # Vectorize-only mode: (B, H) sentence vectors.
    vecs = jax.block_until_ready(siamese_forward(params, anchor))

    assert loss.shape == ()
    assert vecs.shape == (BATCH, HIDDEN)

    # Sanity check against a pure-JAX (unfused, PyTorch-shaped) reference.
    ref_loss = _ref_loss(ref_params, anchor, positive, negative, MARGIN)
    ref_vecs = _ref_encode(ref_params, anchor)
    assert abs(float(loss) - float(ref_loss)) < 1e-3, (float(loss), float(ref_loss))
    assert float(jnp.max(jnp.abs(vecs - ref_vecs))) < 1e-3

    print("KERNEL_OK")
</pallas_src>

<mosaic_0001>
module attributes {stable_mosaic.version = 11 : i64} {
  func.func @_train_kernel(%arg0: memref<48x1xi32, #tpu.memory_space<vmem>>, %arg1: memref<128x128xf32, #tpu.memory_space<vmem>>, %arg2: memref<1x128xf32, #tpu.memory_space<vmem>>, %arg3: memref<1x1xf32, #tpu.memory_space<smem>>) attributes {dimension_semantics = [], scalar_prefetch = 0 : i64, scratch_operands = 0 : i64, tpu.core_type = #tpu.core_type<tc>} {
    %c0 = arith.constant 0 : index
    %c0_0 = arith.constant 0 : index
    %0 = vector.load %arg0[%c0, %c0_0] : memref<48x1xi32, #tpu.memory_space<vmem>>, vector<48x1xi32>
    %c0_1 = arith.constant 0 : index
    %c0_2 = arith.constant 0 : index
    %1 = vector.load %arg1[%c0_1, %c0_2] : memref<128x128xf32, #tpu.memory_space<vmem>>, vector<128x128xf32>
    %2 = tpu.iota {dimensions = array<i32: 1>} : vector<48x128xi32>
    %3 = vector.broadcast %0 : vector<48x1xi32> to vector<48x128xi32>
    %4 = arith.cmpi eq, %3, %2 : vector<48x128xi32>
    %5 = arith.extui %4 : vector<48x128xi1> to vector<48x128xi32>
    %6 = arith.sitofp %5 : vector<48x128xi32> to vector<48x128xf32>
    %cst = arith.constant dense<0.000000e+00> : vector<48x128xf32>
    %7 = tpu.matmul %6, %1, %cst {dimension_numbers = #tpu.dot_dimension_numbers<[1], [0], [0], [1], [0, 0, 1, 1], [], []>} : vector<48x128xf32>, vector<128x128xf32>, vector<48x128xf32> -> vector<48x128xf32>
    %8 = vector.shape_cast %7 : vector<48x128xf32> to vector<6x8x128xf32>
    %cst_3 = arith.constant dense<0xFF800000> : vector<6x128xf32>
    %9 = vector.multi_reduction <maximumf>, %8, %cst_3 [1] : vector<6x8x128xf32> to vector<6x128xf32>
    %c0_4 = arith.constant 0 : index
    %c0_5 = arith.constant 0 : index
    %10 = vector.load %arg2[%c0_4, %c0_5] : memref<1x128xf32, #tpu.memory_space<vmem>>, vector<1x128xf32>
    %11 = vector.broadcast %10 : vector<1x128xf32> to vector<6x128xf32>
    %12 = arith.addf %9, %11 : vector<6x128xf32>
    %13 = vector.extract_strided_slice %12 {offsets = [0, 0], sizes = [2, 128], strides = [1, 1]} : vector<6x128xf32> to vector<2x128xf32>
    %14 = vector.extract_strided_slice %12 {offsets = [2, 0], sizes = [2, 128], strides = [1, 1]} : vector<6x128xf32> to vector<2x128xf32>
    %15 = vector.extract_strided_slice %12 {offsets = [4, 0], sizes = [2, 128], strides = [1, 1]} : vector<6x128xf32> to vector<2x128xf32>
    %16 = arith.mulf %13, %13 : vector<2x128xf32>
    %cst_6 = arith.constant dense<0.000000e+00> : vector<2xf32>
    %17 = vector.multi_reduction <add>, %16, %cst_6 [1] : vector<2x128xf32> to vector<2xf32>
    %18 = vector.shape_cast %17 : vector<2xf32> to vector<2x1xf32>
    %cst_7 = arith.constant 1.000000e-24 : f32
    %19 = vector.broadcast %cst_7 : f32 to vector<2x1xf32>
    %20 = arith.maximumf %18, %19 : vector<2x1xf32>
    %21 = math.rsqrt %20 : vector<2x1xf32>
    %22 = arith.mulf %14, %14 : vector<2x128xf32>
    %cst_8 = arith.constant dense<0.000000e+00> : vector<2xf32>
    %23 = vector.multi_reduction <add>, %22, %cst_8 [1] : vector<2x128xf32> to vector<2xf32>
    %24 = vector.shape_cast %23 : vector<2xf32> to vector<2x1xf32>
    %cst_9 = arith.constant 1.000000e-24 : f32
    %25 = vector.broadcast %cst_9 : f32 to vector<2x1xf32>
    %26 = arith.maximumf %24, %25 : vector<2x1xf32>
    %27 = math.rsqrt %26 : vector<2x1xf32>
    %28 = arith.mulf %15, %15 : vector<2x128xf32>
    %cst_10 = arith.constant dense<0.000000e+00> : vector<2xf32>
    %29 = vector.multi_reduction <add>, %28, %cst_10 [1] : vector<2x128xf32> to vector<2xf32>
    %30 = vector.shape_cast %29 : vector<2xf32> to vector<2x1xf32>
    %cst_11 = arith.constant 1.000000e-24 : f32
    %31 = vector.broadcast %cst_11 : f32 to vector<2x1xf32>
    %32 = arith.maximumf %30, %31 : vector<2x1xf32>
    %33 = math.rsqrt %32 : vector<2x1xf32>
    %34 = arith.mulf %13, %14 : vector<2x128xf32>
    %cst_12 = arith.constant dense<0.000000e+00> : vector<2xf32>
    %35 = vector.multi_reduction <add>, %34, %cst_12 [1] : vector<2x128xf32> to vector<2xf32>
    %36 = vector.shape_cast %35 : vector<2xf32> to vector<2x1xf32>
    %37 = arith.mulf %36, %21 : vector<2x1xf32>
    %38 = arith.mulf %37, %27 : vector<2x1xf32>
    %39 = arith.mulf %13, %15 : vector<2x128xf32>
    %cst_13 = arith.constant dense<0.000000e+00> : vector<2xf32>
    %40 = vector.multi_reduction <add>, %39, %cst_13 [1] : vector<2x128xf32> to vector<2xf32>
    %41 = vector.shape_cast %40 : vector<2xf32> to vector<2x1xf32>
    %42 = arith.mulf %41, %21 : vector<2x1xf32>
    %43 = arith.mulf %42, %33 : vector<2x1xf32>
    %44 = arith.subf %43, %38 : vector<2x1xf32>
    %cst_14 = arith.constant 1.000000e-01 : f32
    %45 = vector.broadcast %cst_14 : f32 to vector<2x1xf32>
    %46 = arith.addf %44, %45 : vector<2x1xf32>
    %cst_15 = arith.constant 0.000000e+00 : f32
    %47 = vector.broadcast %cst_15 : f32 to vector<2x1xf32>
    %48 = arith.maximumf %46, %47 : vector<2x1xf32>
    %49 = vector.shape_cast %48 : vector<2x1xf32> to vector<1x2x1xf32>
    %cst_16 = arith.constant dense<0.000000e+00> : vector<1xf32>
    %50 = vector.multi_reduction <add>, %49, %cst_16 [1, 2] : vector<1x2x1xf32> to vector<1xf32>
    %51 = vector.shape_cast %50 : vector<1xf32> to vector<1x1x1xf32>
    %52 = vector.extract %51[0, 0, 0] : f32 from vector<1x1x1xf32>
    %cst_17 = arith.constant 2.000000e+00 : f32
    %53 = arith.divf %52, %cst_17 : f32
    %c0_18 = arith.constant 0 : index
    %c0_19 = arith.constant 0 : index
    %54 = memref.load %arg3[%c0_18, %c0_19] : memref<1x1xf32, #tpu.memory_space<smem>>
    memref.store %53, %arg3[%c0_18, %c0_19] : memref<1x1xf32, #tpu.memory_space<smem>>
    return
  }
}

</mosaic_0001>

<llo_original>
// kernel: siamese_train_loss.1
$region0: #{siamese_train_loss.1}
  #allocation0 [shape = 'u32[]', space=smem, size = 0x4, offset = 0x4, fixed_abs, tag = 'smem constant byte address 0x4 - core index']
  #allocation1 [shape = 'u32[72,128]{1,0:T(1,128)}', space=vmem, size = 0x9000, scoped, tag = 'internal scratch']
  %s0 = inlined_call_operand.vmem [shape: s32[48,1], index: 0, kind: input, shape index: {}]
  %s1 = inlined_call_operand.hbm [shape: f32[128,128], index: 1, kind: input, shape index: {}]
  %s2 = inlined_call_operand.vmem [shape: f32[1,128], index: 2, kind: input, shape index: {}]
  %s3 = inlined_call_operand.hbm [shape: f32[1,1], index: 3, kind: output, shape index: {}]
  %s4 = sld [smem:[#allocation0]]
  $region26: #{siamese_train_loss.1} parent=0
    _
  %s6 = ssub.s32 1, %s4
  %s7 = scalar_select 0, %s6, %s4
  $region1: #{siamese_train_loss.1} parent=0
    #allocation2 [shape = 'u8[65536]{0}', space=vmem, size = 0x10000, scoped, tag = 'input window, operand 1, single buffered']
    #allocation3 [shape = 's32[1]{0}', space=sflag, size = 0x4, scoped, tag = 'scoped memory for siamese_train_loss.1']
    #allocation4 [shape = 's32[1]{0}', space=sflag, size = 0x4, scoped, tag = 'scoped memory for siamese_train_loss.1']
    #allocation5 [shape = 'u8[512]{0}', space=smem, size = 0x200, scoped, tag = 'output window, operand 0, single buffered']
    %8 = vsyncpa [#allocation3], 0
    %9 = vsyncpa [#allocation4], 0
    // Predicated region
    $region2: #{siamese_train_loss.1} parent=1 // pred_check
      _
    $region3: #{siamese_train_loss.1} parent=1 // pred_check_branch
      %11 = sbr.rel (0) target = $region5
    $region4: #{siamese_train_loss.1} parent=1 // pred_region
      _
    $region5: #{siamese_train_loss.1} parent=1 // pred_fallthru
      _
    // Predicated region
    $region6: #{siamese_train_loss.1} parent=1 // pred_check
      _
    $region7: #{siamese_train_loss.1} parent=1 // pred_check_branch
      %13 = sbr.rel (0) target = $region9
    $region8: #{siamese_train_loss.1} parent=1 // pred_region
      %15 = vsyncadd [#allocation3], 0
      %s16 = sshll.u32 %s1, 4
      %s17 = int_to_ptr.hbm [resolvable:$true] %s16
      %s18 = sshll.u32 [#allocation2], 4
      %s19 = int_to_ptr.vmem [resolvable:$true] %s18
      %24 = dma.hbm_to_vmem [thread:$0]  %s17, 2048, %s19, [#allocation3], 128, 128, 8
    $region9: #{siamese_train_loss.1} parent=1 // pred_fallthru
      _
    // Predicated region
    $region10: #{siamese_train_loss.1} parent=1 // pred_check
      _
    $region11: #{siamese_train_loss.1} parent=1 // pred_check_branch
      %26 = sbr.rel (0) target = $region13
    $region12: #{siamese_train_loss.1} parent=1 // pred_region
      _
    $region13: #{siamese_train_loss.1} parent=1 // pred_fallthru
      _
    // Predicated region
    $region14: #{siamese_train_loss.1} parent=1 // pred_check
      _
    $region15: #{siamese_train_loss.1} parent=1 // pred_check_branch
      %28 = sbr.rel (0) target = $region17
    $region16: #{siamese_train_loss.1} parent=1 // pred_region
      %30 = dma.done [#allocation3], 2048
    $region17: #{siamese_train_loss.1} parent=1 // pred_fallthru
      _
    %v31 = vld [vmem:[%s0] sm:$0xff]
    %v32 = vld [vmem:[%s0 + $0x8] sm:$0xff]
    %v33 = vld [vmem:[%s0 + $0x10] sm:$0xff]
    %v34 = vld [vmem:[%s0 + $0x18] sm:$0xff]
    %v35 = vld [vmem:[%s0 + $0x20] sm:$0xff]
    %v36 = vld [vmem:[%s0 + $0x28] sm:$0xff]
    %v37 = vld [vmem:[#allocation2] sm:$0xff]
    %v38 = vld [vmem:[#allocation2 + $0x8] sm:$0xff]
    %v39 = vld [vmem:[#allocation2 + $0x10] sm:$0xff]
    %v40 = vld [vmem:[#allocation2 + $0x18] sm:$0xff]
    %v41 = vld [vmem:[#allocation2 + $0x20] sm:$0xff]
    %v42 = vld [vmem:[#allocation2 + $0x28] sm:$0xff]
    %v43 = vld [vmem:[#allocation2 + $0x30] sm:$0xff]
    %v44 = vld [vmem:[#allocation2 + $0x38] sm:$0xff]
    %v45 = vld [vmem:[#allocation2 + $0x40] sm:$0xff]
    %v46 = vld [vmem:[#allocation2 + $0x48] sm:$0xff]
    %v47 = vld [vmem:[#allocation2 + $0x50] sm:$0xff]
    %v48 = vld [vmem:[#allocation2 + $0x58] sm:$0xff]
    %v49 = vld [vmem:[#allocation2 + $0x60] sm:$0xff]
    %v50 = vld [vmem:[#allocation2 + $0x68] sm:$0xff]
    %v51 = vld [vmem:[#allocation2 + $0x70] sm:$0xff]
    %v52 = vld [vmem:[#allocation2 + $0x78] sm:$0xff]
    %v53 = vlaneseq
    %v54 = vand.u32 %v53, 127
    %55 = vset.pattern.permute.xlu0 0
    %56 = vperm.xlu0 %55, %v31
    %v57 = vpop.permute.xlu0 %56
    %58 = vset.pattern.permute.xlu0 0
    %59 = vperm.xlu0 %58, %v32
    %v60 = vpop.permute.xlu0 %59
    %61 = vset.pattern.permute.xlu0 0
    %62 = vperm.xlu0 %61, %v33
    %v63 = vpop.permute.xlu0 %62
    %64 = vset.pattern.permute.xlu0 0
    %65 = vperm.xlu0 %64, %v34
    %v66 = vpop.permute.xlu0 %65
    %67 = vset.pattern.permute.xlu0 0
    %68 = vperm.xlu0 %67, %v35
    %v69 = vpop.permute.xlu0 %68
    %70 = vset.pattern.permute.xlu0 0
    %71 = vperm.xlu0 %70, %v36
    %v72 = vpop.permute.xlu0 %71
    %vm73 = vcmp.eq.s32.totalorder %v57, %v54
    %vm74 = vcmp.eq.s32.totalorder %v60, %v54
    %vm75 = vcmp.eq.s32.totalorder %v63, %v54
    %vm76 = vcmp.eq.s32.totalorder %v66, %v54
    %vm77 = vcmp.eq.s32.totalorder %v69, %v54
    %vm78 = vcmp.eq.s32.totalorder %v72, %v54
    %v79 = vsel %vm73, 1, 0
    %v80 = vsel %vm74, 1, 0
    %v81 = vsel %vm75, 1, 0
    %v82 = vsel %vm76, 1, 0
    %v83 = vsel %vm77, 1, 0
    %v84 = vsel %vm78, 1, 0
    %v85 = vcvt.s32.f32 %v79
    %v86 = vcvt.s32.f32 %v80
    %v87 = vcvt.s32.f32 %v81
    %v88 = vcvt.s32.f32 %v82
    %v89 = vcvt.s32.f32 %v83
    %v90 = vcvt.s32.f32 %v84
    %91 = vmatpush.msra.mxu0 %v52
    %92 = vmatpush.msra.mxu0 %v51
    %93 = vmatpush.msra.mxu0 %v50
    %94 = vmatpush.msra.mxu0 %v49
    %95 = vmatpush.msra.mxu0 %v48
    %96 = vmatpush.msra.mxu0 %v47
    %97 = vmatpush.msra.mxu0 %v46
    %98 = vmatpush.msra.mxu0 %v45
    %99 = vmatpush.msra.mxu0 %v44
    %100 = vmatpush.msra.mxu0 %v43
    %101 = vmatpush.msra.mxu0 %v42
    %102 = vmatpush.msra.mxu0 %v41
    %103 = vmatpush.msra.mxu0 %v40
    %104 = vmatpush.msra.mxu0 %v39
    %105 = vmatpush.msra.mxu0 %v38
    %106 = vmatpush.msra.mxu0 %v37
    %107 = vmatmul.f32.gmra.mxu0 %v85
    %v108 = vpop.f32.mrf.mxu0
    %v109 = vadd.f32 0.0, %v108
    %110 = vmatmul.f32.gmra.mxu0 %v86
    %v111 = vpop.f32.mrf.mxu0
    %v112 = vadd.f32 0.0, %v111
    %113 = vmatmul.f32.gmra.mxu0 %v87
    %v114 = vpop.f32.mrf.mxu0
    %v115 = vadd.f32 0.0, %v114
    %116 = vmatmul.f32.gmra.mxu0 %v88
    %v117 = vpop.f32.mrf.mxu0
    %v118 = vadd.f32 0.0, %v117
    %119 = vmatmul.f32.gmra.mxu0 %v89
    %v120 = vpop.f32.mrf.mxu0
    %v121 = vadd.f32 0.0, %v120
    %122 = vmatmul.f32.gmra.mxu0 %v90
    %v123 = vpop.f32.mrf.mxu0
    %v124 = vadd.f32 0.0, %v123
    %125 = vdwg.mxu0
    %v126 = vrot.slane %v109, 4
    %v127 = vmax.f32 %v109, %v126
    %v128 = vrot.slane %v127, 2
    %v129 = vmax.f32 %v127, %v128
    %v130 = vrot.slane %v129, 1
    %v131 = vmax.f32 %v129, %v130
    %v132 = vrot.slane %v112, 4
    %v133 = vmax.f32 %v112, %v132
    %v134 = vrot.slane %v133, 2
    %v135 = vmax.f32 %v133, %v134
    %v136 = vrot.slane %v135, 1
    %v137 = vmax.f32 %v135, %v136
    %v138 = vrot.slane %v115, 4
    %v139 = vmax.f32 %v115, %v138
    %v140 = vrot.slane %v139, 2
    %v141 = vmax.f32 %v139, %v140
    %v142 = vrot.slane %v141, 1
    %v143 = vmax.f32 %v141, %v142
    %v144 = vrot.slane %v118, 4
    %v145 = vmax.f32 %v118, %v144
    %v146 = vrot.slane %v145, 2
    %v147 = vmax.f32 %v145, %v146
    %v148 = vrot.slane %v147, 1
    %v149 = vmax.f32 %v147, %v148
    %v150 = vrot.slane %v121, 4
    %v151 = vmax.f32 %v121, %v150
    %v152 = vrot.slane %v151, 2
    %v153 = vmax.f32 %v151, %v152
    %v154 = vrot.slane %v153, 1
    %v155 = vmax.f32 %v153, %v154
    %v156 = vrot.slane %v124, 4
    %v157 = vmax.f32 %v124, %v156
    %v158 = vrot.slane %v157, 2
    %v159 = vmax.f32 %v157, %v158
    %v160 = vrot.slane %v159, 1
    %v161 = vmax.f32 %v159, %v160
    %v162 = vld [vmem:[%s2] sm:$0x1]
    %v164 = vperm.slane %v162, 0
    %v166 = vadd.f32 %v131, %v164
    %v167 = vadd.f32 %v137, %v164
    %v168 = vadd.f32 %v143, %v164
    %v169 = vadd.f32 %v149, %v164
    %v170 = vadd.f32 %v155, %v164
    %v171 = vadd.f32 %v161, %v164
    %v172 = vmul.f32 %v166, %v166
    %v173 = vmul.f32 %v167, %v167
    %v176 = vrot.slane %v173, 7
    %vm177 = vcmask 1041409
    %v178 = vsel %vm177, %v176, %v172
    %vm180 = vcmask 1041408
    %v181 = vsel %vm180, %v178, 0.0
    %182 = vadd.xlane.f32.xlu0 %v181
    %v183 = vpop.xlane.xlu0 %182
    %v184 = vmax.f32 %v183, 1e-24
    %v185 = vrsqrt.pop %v184
    %v186 = vmul.f32 %v185, %v184
    %v187 = vmul.f32 %v186, %v185
    %v188 = vmul.f32 0.5, %v187
    %v189 = vsub.f32 1.5, %v188
    %v190 = vmul.f32 %v185, %v189
    %vm191 = vweird.f32 %v184
    %vm192 = vweird.f32 %v185
    %vm193 = vmor %vm191, %vm192
    %v194 = vsel %vm193, %v185, %v190
    %v195 = vmul.f32 %v168, %v168
    %v196 = vmul.f32 %v169, %v169
    %v199 = vrot.slane %v196, 7
    %v200 = vsel %vm177, %v199, %v195
    %v202 = vsel %vm180, %v200, 0.0
    %203 = vadd.xlane.f32.xlu0 %v202
    %v204 = vpop.xlane.xlu0 %203
    %v205 = vmax.f32 %v204, 1e-24
    %v206 = vrsqrt.pop %v205
    %v207 = vmul.f32 %v206, %v205
    %v208 = vmul.f32 %v207, %v206
    %v209 = vmul.f32 0.5, %v208
    %v210 = vsub.f32 1.5, %v209
    %v211 = vmul.f32 %v206, %v210
    %vm212 = vweird.f32 %v205
    %vm213 = vweird.f32 %v206
    %vm214 = vmor %vm212, %vm213
    %v215 = vsel %vm214, %v206, %v211
    %v216 = vmul.f32 %v170, %v170
    %v217 = vmul.f32 %v171, %v171
    %v220 = vrot.slane %v217, 7
    %v221 = vsel %vm177, %v220, %v216
    %v223 = vsel %vm180, %v221, 0.0
    %224 = vadd.xlane.f32.xlu0 %v223
    %v225 = vpop.xlane.xlu0 %224
    %v226 = vmax.f32 %v225, 1e-24
    %v227 = vrsqrt.pop %v226
    %v228 = vmul.f32 %v227, %v226
    %v229 = vmul.f32 %v228, %v227
    %v230 = vmul.f32 0.5, %v229
    %v231 = vsub.f32 1.5, %v230
    %v232 = vmul.f32 %v227, %v231
    %vm233 = vweird.f32 %v226
    %vm234 = vweird.f32 %v227
    %vm235 = vmor %vm233, %vm234
    %v236 = vsel %vm235, %v227, %v232
    %v237 = vmul.f32 %v166, %v168
    %v238 = vmul.f32 %v167, %v169
    %v241 = vrot.slane %v238, 7
    %v242 = vsel %vm177, %v241, %v237
    %v244 = vsel %vm180, %v242, 0.0
    %245 = vadd.xlane.f32.xlu0 %v244
    %v246 = vpop.xlane.xlu0 %245
    %v247 = vmul.f32 %v246, %v194
    %v248 = vmul.f32 %v247, %v215
    %v249 = vmul.f32 %v166, %v170
    %v250 = vmul.f32 %v167, %v171
    %v253 = vrot.slane %v250, 7
    %v254 = vsel %vm177, %v253, %v249
    %v256 = vsel %vm180, %v254, 0.0
    %257 = vadd.xlane.f32.xlu0 %v256
    %v258 = vpop.xlane.xlu0 %257
    %v259 = vmul.f32 %v258, %v194
    %v260 = vmul.f32 %v259, %v236
    %v261 = vsub.f32 %v260, %v248
    %v262 = vadd.f32 %v261, 0.1
    %v263 = vmax.f32 %v262, 0.0
    %vm264 = vcmask 1024
    %v265 = vsel %vm264, %v263, 0.0
    %266 = vadd.xlane.f32.xlu0 %v265
    %v267 = vpop.xlane.xlu0 %266
    %v268 = vrot.slane %v267, 4
    %v269 = vadd.f32 %v267, %v268
    %v270 = vrot.slane %v269, 2
    %v271 = vadd.f32 %v269, %v270
    %v272 = vrot.slane %v271, 1
    %v273 = vadd.f32 %v271, %v272
    %s274 = vtos %v273
    %v275 = vrcp.pop 2.0
    %v276 = vmul.f32 2.0, %v275
    %v277 = vsub.f32 1.0, %v276
    %v278 = vmul.f32 %v275, %v277
    %v279 = vadd.f32 %v275, %v278
    %vm280 = vweird.f32 %v275
    %v281 = vsel %vm280, %v275, %v279
    %s282 = vtos %v281
    %s283 = smul.f32 %s274, %s282
    %s284 = scalar_lea.smem [#allocation5], 0
    %285 = sst [smem:[%s284]] %s283
    // Predicated region
    $region18: #{siamese_train_loss.1} parent=1 // pred_check
      _
    $region19: #{siamese_train_loss.1} parent=1 // pred_check_branch
      %287 = sbr.rel (0) target = $region21
    $region20: #{siamese_train_loss.1} parent=1 // pred_region
      %289 = vsyncadd [#allocation4], 0
      %s291 = sshll.u32 %s3, 4
      %s292 = int_to_ptr.hbm [resolvable:$true] %s291
      %294 = dma.smem_to_hbm [#allocation5], 16, %s292, [#allocation4]
    $region21: #{siamese_train_loss.1} parent=1 // pred_fallthru
      _
    // Predicated region
    $region22: #{siamese_train_loss.1} parent=1 // pred_check
      _
    $region23: #{siamese_train_loss.1} parent=1 // pred_check_branch
      %296 = sbr.rel (0) target = $region25
    $region24: #{siamese_train_loss.1} parent=1 // pred_region
      %298 = dma.done [#allocation4], 16
    $region25: #{siamese_train_loss.1} parent=1 // pred_fallthru
      _
    %299 = sfence
    %300 = vsyncpa [#allocation3], 1
    %301 = vsyncpa [#allocation4], 1

</llo_original>
